<compile_context>
chip_gen: v7x
topology: tpu7x:2x2x1
jax: 0.10.0
libtpu: 0.0.40
codegen_flags: <defaults>
</compile_context>

<pallas_src>
import jax
import jax.numpy as jnp
from jax import lax
from jax.experimental import pallas as pl
from jax.experimental.pallas import tpu as pltpu

TAU = 0.1
_TILE_VMEM_BUDGET = 38 * 1024 * 1024     # target working set (fits v7x 64 MiB)
_VMEM_LIMIT_CAP = 48 * 1024 * 1024


def _make_kernel(tau, has_extra, tr, b, npc):
    inv_tau = float(1.0 / tau)            # Python float -> literal, not a const

    def body(pos_ref, neg_ref, extra_ref,
             psum_ref, nsum_ref, lsum_ref,
             pos_acc, neg_acc, loss_acc):
        c = pl.program_id(0)               # core (parallel) axis
        i = pl.program_id(1)               # row-tile axis within this core

        @pl.when(i == 0)
        def _():
            pos_acc[...] = jnp.zeros_like(pos_acc)
            neg_acc[...] = jnp.zeros_like(neg_acc)
            loss_acc[...] = jnp.zeros_like(loss_acc)

        tile_idx = c * npc + i             # un-clamped logical row-tile index

        pos = pos_ref[...].astype(jnp.float32)          # (TR, 1)
        neg = neg_ref[...].astype(jnp.float32)          # (TR, B)

        # Row-validity mask: covers the padded last tile and (clamped) dummy
        # tiles of the parallel split.  Padded rows may hold garbage/NaN; all
        # uses below go through where-selects, so nothing leaks.
        local_row = lax.broadcasted_iota(jnp.int32, (tr, 1), 0)
        global_row = local_row + tile_idx * tr          # (TR, 1)
        valid = global_row < b                          # (TR, 1) bool

        # ---- raw partial sums for mean(pos_sim) / mean(neg_sim) ----
        pos_acc[...] += jnp.sum(jnp.where(valid, pos, 0.0), keepdims=True)
        neg_rowsum = jnp.sum(neg, axis=-1, keepdims=True)           # (TR, 1)
        neg_acc[...] += jnp.sum(jnp.where(valid, neg_rowsum, 0.0),
                                keepdims=True)

        # ---- row-wise LSE of logits/tau with diag(neg) replaced by pos ----
        # Stabilizer taken over the RAW tile (no masked/scaled slab needed).
        row_max = jnp.maximum(jnp.max(neg, axis=-1, keepdims=True), pos)
        if has_extra:
            extra = extra_ref[...].astype(jnp.float32)               # (TR, E)
            row_max = jnp.maximum(row_max,
                                  jnp.max(extra, axis=-1, keepdims=True))

        col = lax.broadcasted_iota(jnp.int32, (1, b), 1)
        diag = global_row == col                                     # (TR, B)
        e_neg = jnp.exp((neg - row_max) * inv_tau)
        e_neg = jnp.where(diag, 0.0, e_neg)      # diagonal excluded from LSE
        sum_exp = (jnp.sum(e_neg, axis=-1, keepdims=True)
                   + jnp.exp((pos - row_max) * inv_tau))
        if has_extra:
            sum_exp += jnp.sum(jnp.exp((extra - row_max) * inv_tau),
                               axis=-1, keepdims=True)

        # loss_r = lse(logits/tau) - pos/tau
        loss_rows = jnp.log(sum_exp) + (row_max - pos) * inv_tau     # (TR, 1)
        loss_acc[...] += jnp.sum(jnp.where(valid, loss_rows, 0.0),
                                 keepdims=True)

        # ---- per-core partial writeback on this core's last row tile ----
        @pl.when(i == npc - 1)
        def _():
            psum_ref[0, 0] = jnp.sum(pos_acc[...])
            nsum_ref[0, 0] = jnp.sum(neg_acc[...])
            lsum_ref[0, 0] = jnp.sum(loss_acc[...])

    if has_extra:
        def kernel(pos_ref, neg_ref, extra_ref, psum_ref, nsum_ref, lsum_ref,
                   pos_acc, neg_acc, loss_acc):
            body(pos_ref, neg_ref, extra_ref, psum_ref, nsum_ref, lsum_ref,
                 pos_acc, neg_acc, loss_acc)
    else:
        def kernel(pos_ref, neg_ref, psum_ref, nsum_ref, lsum_ref,
                   pos_acc, neg_acc, loss_acc):
            body(pos_ref, neg_ref, None, psum_ref, nsum_ref, lsum_ref,
                 pos_acc, neg_acc, loss_acc)
    return kernel


def _pick_row_tile(b, e, in_itemsize, budget_bytes=_TILE_VMEM_BUDGET):
    """Largest row tile whose working set fits the VMEM budget.

    Counts the double-buffered input blocks at their REAL dtype plus ~3 live
    f32 (TR, B+E) temporaries (upcast / exp results)."""
    if b <= 8:
        return b
    width = b + e + 1
    per_row = 2 * width * in_itemsize + 3 * (b + e) * 4
    tr = budget_bytes // max(per_row, 1)
    if tr >= b:
        return b
    tr = min(tr, 1024)
    return max(8, (tr // 8) * 8)


def infonce_forward(pos_sim, neg_sim, sim_extra_obj=None, tau=TAU,
                    row_tile=None, num_cores=2):
    """Returns [mean(pos_sim), mean(neg_sim), cross_entropy_loss] scalars."""
    b = neg_sim.shape[0]
    assert neg_sim.shape == (b, b)
    assert pos_sim.shape == (b, 1)
    has_extra = sim_extra_obj is not None
    e = sim_extra_obj.shape[1] if has_extra else 0
    if has_extra:
        assert sim_extra_obj.shape[0] == b

    in_itemsize = jnp.dtype(neg_sim.dtype).itemsize
    tr = row_tile if row_tile is not None else _pick_row_tile(b, e, in_itemsize)
    n_tiles = pl.cdiv(b, tr)
    nc = num_cores if n_tiles >= 2 else 1   # v7x has 2 TCs; free on 1-TC chips
    npc = pl.cdiv(n_tiles, nc)              # row tiles per core

    kernel = _make_kernel(tau=tau, has_extra=has_extra, tr=tr, b=b, npc=npc)

    # All inputs share the row-block map.  Dummy tiles (when nc*npc > n_tiles)
    # are clamped onto the last real tile and fully masked inside the kernel.
    def row_blk(c, i):
        return (jnp.minimum(c * npc + i, n_tiles - 1), 0)

    in_specs = [
        pl.BlockSpec((tr, 1), row_blk),
        pl.BlockSpec((tr, b), row_blk),
    ]
    inputs = [pos_sim, neg_sim]
    if has_extra:
        in_specs.append(pl.BlockSpec((tr, e), row_blk))
        inputs.append(sim_extra_obj)

    def partial_out_spec():
        return pl.BlockSpec((1, 1), lambda c, i: (c, 0),
                            memory_space=pltpu.MemorySpace.SMEM)

    out_specs = (partial_out_spec(), partial_out_spec(), partial_out_spec())
    out_shape = tuple(jax.ShapeDtypeStruct((nc, 1), jnp.float32)
                      for _ in range(3))

    grid_spec = pltpu.PrefetchScalarGridSpec(
        num_scalar_prefetch=0,
        grid=(nc, npc),
        in_specs=in_specs,
        out_specs=out_specs,
        scratch_shapes=[pltpu.VMEM((1, 1), jnp.float32)] * 3,
    )

    # Scoped-VMEM limit matching the tile plan (double-buffered inputs at the
    # real itemsize + ~3 f32 temporaries), capped so it also fits v7x (64 MiB).
    plan_bytes = (2 * tr * (b + e + 1) * in_itemsize
                  + 3 * tr * (b + e) * 4 + (64 << 10))
    vmem_limit = int(min(_VMEM_LIMIT_CAP, max(32 << 20, plan_bytes * 5 // 4)))

    bytes_accessed = int(sum(x.size * jnp.dtype(x.dtype).itemsize
                             for x in inputs) + 3 * nc * 4)
    transcendentals = int(b * (b + e + 1) + b)   # exps per logit + log per row
    flops = int(6 * b * (b + e + 1))

    psum, nsum, lsum = pl.pallas_call(
        kernel,
        out_shape=out_shape,
        grid_spec=grid_spec,
        compiler_params=pltpu.CompilerParams(
            dimension_semantics=("parallel", "arbitrary"),
            vmem_limit_bytes=vmem_limit),
        cost_estimate=pl.CostEstimate(flops=flops,
                                      transcendentals=transcendentals,
                                      bytes_accessed=bytes_accessed),
    )(*inputs)

    bf = jnp.float32(b)
    mean_pos = jnp.sum(psum) / bf
    mean_neg = jnp.sum(nsum) / (bf * bf)
    loss = jnp.sum(lsum) / bf
    return [mean_pos, mean_neg, loss]


def _reference(pos_sim, neg_sim, sim_extra_obj=None, tau=TAU):
    pos_sim = pos_sim.astype(jnp.float32)
    neg_sim = neg_sim.astype(jnp.float32)
    b = neg_sim.shape[0]
    eye = jnp.eye(b, dtype=jnp.float32)
    logits = (1.0 - eye) * neg_sim + eye * pos_sim
    if sim_extra_obj is not None:
        logits = jnp.concatenate(
            [logits, sim_extra_obj.astype(jnp.float32)], axis=1)
    logits = logits / tau
    logp = jax.nn.log_softmax(logits, axis=-1)
    loss = -jnp.mean(logp[jnp.arange(b), jnp.arange(b)])
    return [jnp.mean(pos_sim), jnp.mean(neg_sim), loss]


if __name__ == "__main__":
    key = jax.random.PRNGKey(0)
    k1, k2, k3, k4, k5, k6, k7, k8, k9 = jax.random.split(key, 9)

    # Case 1: B=8, f32, no extra negatives (single tile, single core).
    B = 8
    pos = jax.random.normal(k1, (B, 1), dtype=jnp.float32)
    neg = jax.random.normal(k2, (B, B), dtype=jnp.float32)
    out = [jax.block_until_ready(o) for o in infonce_forward(pos, neg)]
    ref = _reference(pos, neg)
    for a, r in zip(out, ref):
        assert jnp.allclose(a, r, atol=1e-4, rtol=1e-4), (a, r)

    # Case 2: B=8 with extra negatives, bf16 similarity inputs (half HBM
    # bytes; kernel upcasts to f32 internally).
    extra = jax.random.normal(k3, (B, B), dtype=jnp.float32)
    neg_bf16 = neg.astype(jnp.bfloat16)
    extra_bf16 = extra.astype(jnp.bfloat16)
    out2 = [jax.block_until_ready(o)
            for o in infonce_forward(pos, neg_bf16, extra_bf16)]
    ref2 = _reference(pos, neg_bf16, extra_bf16)
    for a, r in zip(out2, ref2):
        assert jnp.allclose(a, r, atol=2e-3, rtol=2e-3), (a, r)

    # Case 3: B=20 (not a multiple of the row tile), extra negatives, forced
    # row_tile=8 -> 3 row tiles split over the 2-core axis (one clamped dummy
    # tile), exercising the padded-row masking path.
    B2, E2 = 20, 12
    pos3 = jax.random.normal(k4, (B2, 1), dtype=jnp.float32)
    neg3 = jax.random.normal(k5, (B2, B2), dtype=jnp.float32)
    extra3 = jax.random.normal(k6, (B2, E2), dtype=jnp.float32)
    out3 = [jax.block_until_ready(o)
            for o in infonce_forward(pos3, neg3, extra3, row_tile=8)]
    ref3 = _reference(pos3, neg3, extra3)
    for a, r in zip(out3, ref3):
        assert jnp.allclose(a, r, atol=1e-4, rtol=1e-4), (a, r)

    # Case 4: B=96, bf16 neg + extras, forced row_tile=16 -> 6 row tiles,
    # 3 per core (even split, no dummy tile).
    B3, E3 = 96, 40
    pos4 = jax.random.normal(k7, (B3, 1), dtype=jnp.float32)
    neg4 = jax.random.normal(k8, (B3, B3), dtype=jnp.float32).astype(jnp.bfloat16)
    extra4 = jax.random.normal(k9, (B3, E3), dtype=jnp.float32).astype(jnp.bfloat16)
    out4 = [jax.block_until_ready(o)
            for o in infonce_forward(pos4, neg4, extra4, row_tile=16)]
    ref4 = _reference(pos4, neg4, extra4)
    for a, r in zip(out4, ref4):
        assert jnp.allclose(a, r, atol=2e-3, rtol=2e-3), (a, r)

    print("KERNEL_OK")
</pallas_src>

<mosaic_0001>
module attributes {stable_mosaic.version = 11 : i64} {
  func.func @kernel(%arg0: i32, %arg1: i32, %arg2: memref<8x1xf32, #tpu.memory_space<vmem>>, %arg3: memref<8x8xf32, #tpu.memory_space<vmem>>, %arg4: memref<1x1xf32, #tpu.memory_space<smem>>, %arg5: memref<1x1xf32, #tpu.memory_space<smem>>, %arg6: memref<1x1xf32, #tpu.memory_space<smem>>, %arg7: memref<1x1xf32, #tpu.memory_space<vmem>>, %arg8: memref<1x1xf32, #tpu.memory_space<vmem>>, %arg9: memref<1x1xf32, #tpu.memory_space<vmem>>) attributes {dimension_semantics = [#tpu.dimension_semantics<parallel>, #tpu.dimension_semantics<arbitrary>], iteration_bounds = array<i64: 1, 1>, scalar_prefetch = 0 : i64, scratch_operands = 3 : i64, tpu.core_type = #tpu.core_type<tc>, window_params = [{transform_indices = @transform_0, window_bounds = array<i64: 8, 1>}, {transform_indices = @transform_1, window_bounds = array<i64: 8, 8>}, {transform_indices = @transform_2, window_bounds = array<i64: 1, 1>}, {transform_indices = @transform_3, window_bounds = array<i64: 1, 1>}, {transform_indices = @transform_4, window_bounds = array<i64: 1, 1>}]} {
    %c0_i32 = arith.constant 0 : i32
    %0 = arith.cmpi eq, %arg1, %c0_i32 : i32
    %1 = arith.extui %0 : i1 to i32
    %c0_i32_0 = arith.constant 0 : i32
    %2 = arith.cmpi ne, %1, %c0_i32_0 : i32
    scf.if %2 {
      %cst_31 = arith.constant 0.000000e+00 : f32
      %74 = vector.broadcast %cst_31 : f32 to vector<1x1xf32>
      %c0_32 = arith.constant 0 : index
      %c0_33 = arith.constant 0 : index
      %75 = vector.load %arg7[%c0_32, %c0_33] : memref<1x1xf32, #tpu.memory_space<vmem>>, vector<1x1xf32>
      tpu.vector_store %arg7[%c0_32, %c0_33], %74 {strides = array<i32>} : memref<1x1xf32, #tpu.memory_space<vmem>>, vector<1x1xf32>,
      %cst_34 = arith.constant 0.000000e+00 : f32
      %76 = vector.broadcast %cst_34 : f32 to vector<1x1xf32>
      %c0_35 = arith.constant 0 : index
      %c0_36 = arith.constant 0 : index
      %77 = vector.load %arg8[%c0_35, %c0_36] : memref<1x1xf32, #tpu.memory_space<vmem>>, vector<1x1xf32>
      tpu.vector_store %arg8[%c0_35, %c0_36], %76 {strides = array<i32>} : memref<1x1xf32, #tpu.memory_space<vmem>>, vector<1x1xf32>,
      %cst_37 = arith.constant 0.000000e+00 : f32
      %78 = vector.broadcast %cst_37 : f32 to vector<1x1xf32>
      %c0_38 = arith.constant 0 : index
      %c0_39 = arith.constant 0 : index
      %79 = vector.load %arg9[%c0_38, %c0_39] : memref<1x1xf32, #tpu.memory_space<vmem>>, vector<1x1xf32>
      tpu.vector_store %arg9[%c0_38, %c0_39], %78 {strides = array<i32>} : memref<1x1xf32, #tpu.memory_space<vmem>>, vector<1x1xf32>,
    } else {
    }
    %c1_i32 = arith.constant 1 : i32
    %3 = arith.muli %arg0, %c1_i32 : i32
    %4 = arith.addi %3, %arg1 : i32
    %c0 = arith.constant 0 : index
    %c0_1 = arith.constant 0 : index
    %5 = vector.load %arg2[%c0, %c0_1] : memref<8x1xf32, #tpu.memory_space<vmem>>, vector<8x1xf32>
    %c0_2 = arith.constant 0 : index
    %c0_3 = arith.constant 0 : index
    %6 = vector.load %arg3[%c0_2, %c0_3] : memref<8x8xf32, #tpu.memory_space<vmem>>, vector<8x8xf32>
    %7 = tpu.iota {dimensions = array<i32: 0>} : vector<8x1xi32>
    %c8_i32 = arith.constant 8 : i32
    %8 = arith.muli %4, %c8_i32 : i32
    %9 = vector.broadcast %8 : i32 to vector<8x1xi32>
    %10 = arith.addi %7, %9 : vector<8x1xi32>
    %c8_i32_4 = arith.constant 8 : i32
    %11 = vector.broadcast %c8_i32_4 : i32 to vector<8x1xi32>
    %12 = arith.cmpi slt, %10, %11 : vector<8x1xi32>
    %c0_5 = arith.constant 0 : index
    %c0_6 = arith.constant 0 : index
    %13 = vector.load %arg7[%c0_5, %c0_6] : memref<1x1xf32, #tpu.memory_space<vmem>>, vector<1x1xf32>
    %cst = arith.constant 0.000000e+00 : f32
    %14 = vector.broadcast %cst : f32 to vector<8x1xf32>
    %15 = arith.select %12, %5, %14 : vector<8x1xi1>, vector<8x1xf32>
    %16 = vector.shape_cast %15 : vector<8x1xf32> to vector<1x8x1xf32>
    %cst_7 = arith.constant dense<0.000000e+00> : vector<1xf32>
    %17 = vector.multi_reduction <add>, %16, %cst_7 [1, 2] : vector<1x8x1xf32> to vector<1xf32>
    %18 = vector.shape_cast %17 : vector<1xf32> to vector<1x1x1xf32>
    %19 = vector.extract %18[0, 0, 0] : f32 from vector<1x1x1xf32>
    %20 = vector.broadcast %19 : f32 to vector<1x1xf32>
    %21 = arith.addf %13, %20 : vector<1x1xf32>
    %c0_8 = arith.constant 0 : index
    %c0_9 = arith.constant 0 : index
    %22 = vector.load %arg7[%c0_8, %c0_9] : memref<1x1xf32, #tpu.memory_space<vmem>>, vector<1x1xf32>
    tpu.vector_store %arg7[%c0_8, %c0_9], %21 {strides = array<i32>} : memref<1x1xf32, #tpu.memory_space<vmem>>, vector<1x1xf32>,
    %cst_10 = arith.constant dense<0.000000e+00> : vector<8xf32>
    %23 = vector.multi_reduction <add>, %6, %cst_10 [1] : vector<8x8xf32> to vector<8xf32>
    %24 = vector.shape_cast %23 : vector<8xf32> to vector<8x1xf32>
    %c0_11 = arith.constant 0 : index
    %c0_12 = arith.constant 0 : index
    %25 = vector.load %arg8[%c0_11, %c0_12] : memref<1x1xf32, #tpu.memory_space<vmem>>, vector<1x1xf32>
    %cst_13 = arith.constant 0.000000e+00 : f32
    %26 = vector.broadcast %cst_13 : f32 to vector<8x1xf32>
    %27 = arith.select %12, %24, %26 : vector<8x1xi1>, vector<8x1xf32>
    %28 = vector.shape_cast %27 : vector<8x1xf32> to vector<1x8x1xf32>
    %cst_14 = arith.constant dense<0.000000e+00> : vector<1xf32>
    %29 = vector.multi_reduction <add>, %28, %cst_14 [1, 2] : vector<1x8x1xf32> to vector<1xf32>
    %30 = vector.shape_cast %29 : vector<1xf32> to vector<1x1x1xf32>
    %31 = vector.extract %30[0, 0, 0] : f32 from vector<1x1x1xf32>
    %32 = vector.broadcast %31 : f32 to vector<1x1xf32>
    %33 = arith.addf %25, %32 : vector<1x1xf32>
    %c0_15 = arith.constant 0 : index
    %c0_16 = arith.constant 0 : index
    %34 = vector.load %arg8[%c0_15, %c0_16] : memref<1x1xf32, #tpu.memory_space<vmem>>, vector<1x1xf32>
    tpu.vector_store %arg8[%c0_15, %c0_16], %33 {strides = array<i32>} : memref<1x1xf32, #tpu.memory_space<vmem>>, vector<1x1xf32>,
    %cst_17 = arith.constant dense<0xFF800000> : vector<8xf32>
    %35 = vector.multi_reduction <maximumf>, %6, %cst_17 [1] : vector<8x8xf32> to vector<8xf32>
    %36 = vector.shape_cast %35 : vector<8xf32> to vector<8x1xf32>
    %37 = arith.maximumf %36, %5 : vector<8x1xf32>
    %38 = tpu.iota {dimensions = array<i32: 1>} : vector<1x8xi32>
    %39 = vector.broadcast %10 : vector<8x1xi32> to vector<8x8xi32>
    %40 = vector.broadcast %38 : vector<1x8xi32> to vector<8x8xi32>
    %41 = arith.cmpi eq, %39, %40 : vector<8x8xi32>
    %42 = vector.broadcast %37 : vector<8x1xf32> to vector<8x8xf32>
    %43 = arith.subf %6, %42 : vector<8x8xf32>
    %cst_18 = arith.constant 1.000000e+01 : f32
    %44 = vector.broadcast %cst_18 : f32 to vector<8x8xf32>
    %45 = arith.mulf %43, %44 : vector<8x8xf32>
    %46 = math.exp %45 : vector<8x8xf32>
    %cst_19 = arith.constant 0.000000e+00 : f32
    %47 = vector.broadcast %cst_19 : f32 to vector<8x8xf32>
    %48 = arith.select %41, %47, %46 : vector<8x8xi1>, vector<8x8xf32>
    %cst_20 = arith.constant dense<0.000000e+00> : vector<8xf32>
    %49 = vector.multi_reduction <add>, %48, %cst_20 [1] : vector<8x8xf32> to vector<8xf32>
    %50 = vector.shape_cast %49 : vector<8xf32> to vector<8x1xf32>
    %51 = arith.subf %5, %37 : vector<8x1xf32>
    %cst_21 = arith.constant 1.000000e+01 : f32
    %52 = vector.broadcast %cst_21 : f32 to vector<8x1xf32>
    %53 = arith.mulf %51, %52 : vector<8x1xf32>
    %54 = math.exp %53 : vector<8x1xf32>
    %55 = arith.addf %50, %54 : vector<8x1xf32>
    %56 = math.log %55 : vector<8x1xf32>
    %57 = arith.subf %37, %5 : vector<8x1xf32>
    %cst_22 = arith.constant 1.000000e+01 : f32
    %58 = vector.broadcast %cst_22 : f32 to vector<8x1xf32>
    %59 = arith.mulf %57, %58 : vector<8x1xf32>
    %60 = arith.addf %56, %59 : vector<8x1xf32>
    %c0_23 = arith.constant 0 : index
    %c0_24 = arith.constant 0 : index
    %61 = vector.load %arg9[%c0_23, %c0_24] : memref<1x1xf32, #tpu.memory_space<vmem>>, vector<1x1xf32>
    %cst_25 = arith.constant 0.000000e+00 : f32
    %62 = vector.broadcast %cst_25 : f32 to vector<8x1xf32>
    %63 = arith.select %12, %60, %62 : vector<8x1xi1>, vector<8x1xf32>
    %64 = vector.shape_cast %63 : vector<8x1xf32> to vector<1x8x1xf32>
    %cst_26 = arith.constant dense<0.000000e+00> : vector<1xf32>
    %65 = vector.multi_reduction <add>, %64, %cst_26 [1, 2] : vector<1x8x1xf32> to vector<1xf32>
    %66 = vector.shape_cast %65 : vector<1xf32> to vector<1x1x1xf32>
    %67 = vector.extract %66[0, 0, 0] : f32 from vector<1x1x1xf32>
    %68 = vector.broadcast %67 : f32 to vector<1x1xf32>
    %69 = arith.addf %61, %68 : vector<1x1xf32>
    %c0_27 = arith.constant 0 : index
    %c0_28 = arith.constant 0 : index
    %70 = vector.load %arg9[%c0_27, %c0_28] : memref<1x1xf32, #tpu.memory_space<vmem>>, vector<1x1xf32>
    tpu.vector_store %arg9[%c0_27, %c0_28], %69 {strides = array<i32>} : memref<1x1xf32, #tpu.memory_space<vmem>>, vector<1x1xf32>,
    %c0_i32_29 = arith.constant 0 : i32
    %71 = arith.cmpi eq, %arg1, %c0_i32_29 : i32
    %72 = arith.extui %71 : i1 to i32
    %c0_i32_30 = arith.constant 0 : i32
    %73 = arith.cmpi ne, %72, %c0_i32_30 : i32
    scf.if %73 {
      %c0_31 = arith.constant 0 : index
      %c0_32 = arith.constant 0 : index
      %74 = vector.load %arg7[%c0_31, %c0_32] : memref<1x1xf32, #tpu.memory_space<vmem>>, vector<1x1xf32>
      %75 = vector.shape_cast %74 : vector<1x1xf32> to vector<1x1x1xf32>
      %cst_33 = arith.constant dense<0.000000e+00> : vector<1xf32>
      %76 = vector.multi_reduction <add>, %75, %cst_33 [1, 2] : vector<1x1x1xf32> to vector<1xf32>
      %77 = vector.shape_cast %76 : vector<1xf32> to vector<1x1x1xf32>
      %78 = vector.extract %77[0, 0, 0] : f32 from vector<1x1x1xf32>
      %c0_34 = arith.constant 0 : index
      %c0_35 = arith.constant 0 : index
      %79 = memref.load %arg4[%c0_34, %c0_35] : memref<1x1xf32, #tpu.memory_space<smem>>
      memref.store %78, %arg4[%c0_34, %c0_35] : memref<1x1xf32, #tpu.memory_space<smem>>
      %c0_36 = arith.constant 0 : index
      %c0_37 = arith.constant 0 : index
      %80 = vector.load %arg8[%c0_36, %c0_37] : memref<1x1xf32, #tpu.memory_space<vmem>>, vector<1x1xf32>
      %81 = vector.shape_cast %80 : vector<1x1xf32> to vector<1x1x1xf32>
      %cst_38 = arith.constant dense<0.000000e+00> : vector<1xf32>
      %82 = vector.multi_reduction <add>, %81, %cst_38 [1, 2] : vector<1x1x1xf32> to vector<1xf32>
      %83 = vector.shape_cast %82 : vector<1xf32> to vector<1x1x1xf32>
      %84 = vector.extract %83[0, 0, 0] : f32 from vector<1x1x1xf32>
      %c0_39 = arith.constant 0 : index
      %c0_40 = arith.constant 0 : index
      %85 = memref.load %arg5[%c0_39, %c0_40] : memref<1x1xf32, #tpu.memory_space<smem>>
      memref.store %84, %arg5[%c0_39, %c0_40] : memref<1x1xf32, #tpu.memory_space<smem>>
      %c0_41 = arith.constant 0 : index
      %c0_42 = arith.constant 0 : index
      %86 = vector.load %arg9[%c0_41, %c0_42] : memref<1x1xf32, #tpu.memory_space<vmem>>, vector<1x1xf32>
      %87 = vector.shape_cast %86 : vector<1x1xf32> to vector<1x1x1xf32>
      %cst_43 = arith.constant dense<0.000000e+00> : vector<1xf32>
      %88 = vector.multi_reduction <add>, %87, %cst_43 [1, 2] : vector<1x1x1xf32> to vector<1xf32>
      %89 = vector.shape_cast %88 : vector<1xf32> to vector<1x1x1xf32>
      %90 = vector.extract %89[0, 0, 0] : f32 from vector<1x1x1xf32>
      %c0_44 = arith.constant 0 : index
      %c0_45 = arith.constant 0 : index
      %91 = memref.load %arg6[%c0_44, %c0_45] : memref<1x1xf32, #tpu.memory_space<smem>>
      memref.store %90, %arg6[%c0_44, %c0_45] : memref<1x1xf32, #tpu.memory_space<smem>>
    } else {
    }
    return
  }
  func.func @transform_0(%arg0: i32, %arg1: i32) -> (i32, i32) {
    %c1_i32 = arith.constant 1 : i32
    %0 = arith.muli %arg0, %c1_i32 : i32
    %1 = arith.addi %0, %arg1 : i32
    %c0_i32 = arith.constant 0 : i32
    %2 = arith.minsi %1, %c0_i32 : i32
    %c0_i32_0 = arith.constant 0 : i32
    %c0_i32_1 = arith.constant 0 : i32
    return %2, %c0_i32_0 : i32, i32
  }
  func.func @transform_1(%arg0: i32, %arg1: i32) -> (i32, i32) {
    %c1_i32 = arith.constant 1 : i32
    %0 = arith.muli %arg0, %c1_i32 : i32
    %1 = arith.addi %0, %arg1 : i32
    %c0_i32 = arith.constant 0 : i32
    %2 = arith.minsi %1, %c0_i32 : i32
    %c0_i32_0 = arith.constant 0 : i32
    %c0_i32_1 = arith.constant 0 : i32
    return %2, %c0_i32_0 : i32, i32
  }
  func.func @transform_2(%arg0: i32, %arg1: i32) -> (i32, i32) {
    %c0_i32 = arith.constant 0 : i32
    %c0_i32_0 = arith.constant 0 : i32
    return %arg0, %c0_i32 : i32, i32
  }
  func.func @transform_3(%arg0: i32, %arg1: i32) -> (i32, i32) {
    %c0_i32 = arith.constant 0 : i32
    %c0_i32_0 = arith.constant 0 : i32
    return %arg0, %c0_i32 : i32, i32
  }
  func.func @transform_4(%arg0: i32, %arg1: i32) -> (i32, i32) {
    %c0_i32 = arith.constant 0 : i32
    %c0_i32_0 = arith.constant 0 : i32
    return %arg0, %c0_i32 : i32, i32
  }
}

</mosaic_0001>

<llo_original>
// kernel: tpu_custom_call.1
$region0: #{tpu_custom_call.1}
  #allocation0 [shape = 'u32[]', space=smem, size = 0x4, offset = 0x4, fixed_abs, tag = 'smem constant byte address 0x4 - core index']
  #allocation1 [shape = 'u32[144,128]{1,0:T(1,128)}', space=vmem, size = 0x12000, scoped, tag = 'internal scratch']
  #allocation2 [shape = 'f32[1,1]{1,0:T(1,128)}', space=vmem, size = 0x200, scoped, tag = 'scratch operand']
  #allocation3 [shape = 'f32[1,1]{1,0:T(1,128)}', space=vmem, size = 0x200, scoped, tag = 'scratch operand']
  #allocation4 [shape = 'f32[1,1]{1,0:T(1,128)}', space=vmem, size = 0x200, scoped, tag = 'scratch operand']
  %s0 = inlined_call_operand.vmem [shape: f32[8,1], index: 0, kind: input, shape index: {}]
  %s1 = inlined_call_operand.vmem [shape: f32[8,8], index: 1, kind: input, shape index: {}]
  %s2 = inlined_call_operand.hbm [shape: f32[1,1], index: 2, kind: output, shape index: {0}]
  %s3 = inlined_call_operand.hbm [shape: f32[1,1], index: 3, kind: output, shape index: {1}]
  %s4 = inlined_call_operand.hbm [shape: f32[1,1], index: 4, kind: output, shape index: {2}]
  %5 = xla_tuple %s2, %s3, %s4
  %s6 = sld [smem:[#allocation0]]
  $region42: #{tpu_custom_call.1} parent=0
    _
  %s8 = ssub.s32 1, %s6
  %s9 = scalar_select 0, %s8, %s6
  $region1: #{tpu_custom_call.1} parent=0
    #allocation5 [shape = 'u8[512]{0}', space=smem, size = 0x200, scoped, tag = 'output window, operand 0, single buffered']
    #allocation6 [shape = 's32[1]{0}', space=sflag, size = 0x4, scoped, tag = 'scoped memory for tpu_custom_call.1']
    #allocation7 [shape = 'u8[512]{0}', space=smem, size = 0x200, scoped, tag = 'output window, operand 1, single buffered']
    #allocation8 [shape = 's32[1]{0}', space=sflag, size = 0x4, scoped, tag = 'scoped memory for tpu_custom_call.1']
    #allocation9 [shape = 'u8[512]{0}', space=smem, size = 0x200, scoped, tag = 'output window, operand 2, single buffered']
    %10 = vsyncpa [#allocation6], 0
    %11 = vsyncpa [#allocation8], 0
    // Predicated region
    $region2: #{tpu_custom_call.1} parent=1 // pred_check
      _
    $region3: #{tpu_custom_call.1} parent=1 // pred_check_branch
      %13 = sbr.rel (0) target = $region5
    $region4: #{tpu_custom_call.1} parent=1 // pred_region
      %s14 = sadd.s32 0, 0
      %p15 = scmp.lt.s32.totalorder %s14, 0
      %s16 = scalar_select %p15, %s14, 0
      %p17 = scmp.lt.s32.totalorder %s16, 0
      %s18 = scalar_select %p17, %s16, 0
      %s19 = smul.addr %s18, 8
      %s20 = scalar_lea.vmem %s0, %s19
      %s21 = sadd.s32 0, 0
      %p22 = scmp.lt.s32.totalorder %s21, 0
      %s23 = scalar_select %p22, %s21, 0
    $region5: #{tpu_custom_call.1} parent=1 // pred_fallthru
      _
    // Predicated region
    $region6: #{tpu_custom_call.1} parent=1 // pred_check
      _
    $region7: #{tpu_custom_call.1} parent=1 // pred_check_branch
      %25 = sbr.rel (0) target = $region9
    $region8: #{tpu_custom_call.1} parent=1 // pred_region
      %s26 = sadd.s32 0, 0
      %p27 = scmp.lt.s32.totalorder %s26, 0
      %s28 = scalar_select %p27, %s26, 0
      %p29 = scmp.lt.s32.totalorder %s28, 0
      %s30 = scalar_select %p29, %s28, 0
      %s31 = smul.addr %s30, 8
      %s32 = scalar_lea.vmem %s1, %s31
      %s33 = sadd.s32 0, 0
      %p34 = scmp.lt.s32.totalorder %s33, 0
      %s35 = scalar_select %p34, %s33, 0
    $region9: #{tpu_custom_call.1} parent=1 // pred_fallthru
      _
    %s36 = sadd.s32 0, 0
    %p37 = scmp.lt.s32.totalorder %s36, 0
    %s38 = scalar_select %p37, %s36, 0
    %p39 = scmp.lt.s32.totalorder %s38, 0
    %s40 = scalar_select %p39, %s38, 0
    %s41 = smul.addr %s40, 8
    %s42 = scalar_lea.vmem %s0, %s41
    %s43 = sadd.s32 0, 0
    %p44 = scmp.lt.s32.totalorder %s43, 0
    %s45 = scalar_select %p44, %s43, 0
    %p46 = scmp.lt.s32.totalorder %s45, 0
    %s47 = scalar_select %p46, %s45, 0
    %s48 = smul.addr %s47, 8
    %s49 = scalar_lea.vmem %s1, %s48
    %s50 = sadd.s32 0, 0
    %p51 = scmp.lt.s32.totalorder %s50, 0
    %s52 = scalar_select %p51, %s50, 0
    %p53 = scmp.lt.s32.totalorder %s52, 0
    %s54 = scalar_select %p53, %s52, 0
    %s55 = smul.addr %s54, 8
    %s56 = scalar_lea.vmem %s0, %s55
    %s57 = sadd.s32 0, 0
    %p58 = scmp.lt.s32.totalorder %s57, 0
    %s59 = scalar_select %p58, %s57, 0
    %s60 = sadd.s32 0, 0
    %p61 = scmp.lt.s32.totalorder %s60, 0
    %s62 = scalar_select %p61, %s60, 0
    %p63 = scmp.lt.s32.totalorder %s62, 0
    %s64 = scalar_select %p63, %s62, 0
    %s65 = smul.addr %s64, 8
    %s66 = scalar_lea.vmem %s1, %s65
    %s67 = sadd.s32 0, 0
    %p68 = scmp.lt.s32.totalorder %s67, 0
    %s69 = scalar_select %p68, %s67, 0
    %p70 = scmp.eq.s32.totalorder 0, 0
    // Predicated region
    $region10: #{tpu_custom_call.1} parent=1 // pred_check
      %p71 = pneg %p70
    $region11: #{tpu_custom_call.1} parent=1 // pred_check_branch
      %73 = sbr.rel (%p71) target = $region13
    $region12: #{tpu_custom_call.1} parent=1 // pred_region
      %vm74 = vcmask 0
      %75 = vst.msk [vmem:[#allocation2] sm:$0x1] %vm74, 0.0
      %76 = vst.msk [vmem:[#allocation3] sm:$0x1] %vm74, 0.0
      %77 = vst.msk [vmem:[#allocation4] sm:$0x1] %vm74, 0.0
    $region13: #{tpu_custom_call.1} parent=1 // pred_fallthru
      _
    %s78 = sadd.s32 0, 0
    %v79 = vld [vmem:[%s56] sm:$0xff]
    %v80 = vld [vmem:[%s66] sm:$0xff]
    %v81 = vlaneseq
    %v82 = vshrl.u32 %v81, 7
    %s83 = smul.u32 %s78, 8
    %v84 = vstv %s83
    %v85 = vadd.s32 %v82, %v84
    %vm86 = vcmp.lt.s32.totalorder %v85, 8
    %v87 = vld [vmem:[#allocation2] sm:$0x1]
    %v88 = vsel %vm86, %v79, 0.0
    %vm89 = vcmask 7168
    %v90 = vsel %vm89, %v88, 0.0
    %91 = vadd.xlane.f32.xlu0 %v90
    %v92 = vpop.xlane.xlu0 %91
    %v93 = vrot.slane %v92, 4
    %v94 = vadd.f32 %v92, %v93
    %v95 = vrot.slane %v94, 2
    %v96 = vadd.f32 %v94, %v95
    %v97 = vrot.slane %v96, 1
    %v98 = vadd.f32 %v96, %v97
    %s99 = vtos %v98
    %v100 = vstv %s99
    %v101 = vadd.f32 %v87, %v100
    %vm102 = vcmask 0
    %103 = vst.msk [vmem:[#allocation2] sm:$0x1] %vm102, %v101
    %vm104 = vcmask 64512
    %v105 = vsel %vm104, %v80, 0.0
    %106 = vadd.xlane.f32.xlu0 %v105
    %v107 = vpop.xlane.xlu0 %106
    %v108 = vld [vmem:[#allocation3] sm:$0x1]
    %v109 = vsel %vm86, %v107, 0.0
    %v110 = vsel %vm89, %v109, 0.0
    %111 = vadd.xlane.f32.xlu0 %v110
    %v112 = vpop.xlane.xlu0 %111
    %v113 = vrot.slane %v112, 4
    %v114 = vadd.f32 %v112, %v113
    %v115 = vrot.slane %v114, 2
    %v116 = vadd.f32 %v114, %v115
    %v117 = vrot.slane %v116, 1
    %v118 = vadd.f32 %v116, %v117
    %s119 = vtos %v118
    %v120 = vstv %s119
    %v121 = vadd.f32 %v108, %v120
    %122 = vst.msk [vmem:[#allocation3] sm:$0x1] %vm102, %v121
    %v123 = vsel %vm104, %v80, -inf
    %124 = vmax.xlane.f32.xlu0 %v123
    %v125 = vpop.xlane.xlu0 %124
    %v126 = vmax.f32 %v125, %v79
    %v127 = vlaneseq
    %v128 = vand.u32 %v127, 127
    %vm129 = vcmp.eq.s32.totalorder %v85, %v128
    %131 = vset.pattern.permute.xlu0 0
    %132 = vperm.xlu0 %131, %v126
    %v133 = vpop.permute.xlu0 %132
    %v135 = vsub.f32 %v80, %v133
    %v136 = vmul.f32 %v135, 10.0
    %v137 = vmul.f32 %v136, 1.442695
    %v138 = vpow.pop %v137
    %v139 = vsel %vm129, 0.0, %v138
    %v140 = vsel %vm104, %v139, 0.0
    %141 = vadd.xlane.f32.xlu0 %v140
    %v142 = vpop.xlane.xlu0 %141
    %v143 = vsub.f32 %v79, %v126
    %v144 = vmul.f32 %v143, 10.0
    %v145 = vmul.f32 %v144, 1.442695
    %v146 = vpow.pop %v145
    %v147 = vadd.f32 %v142, %v146
    %v148 = vlog2.pop %v147
    %v149 = vmul.f32 %v148, 0.6931472
    %v150 = vsub.f32 %v126, %v79
    %v151 = vmul.f32 %v150, 10.0
    %v152 = vadd.f32 %v149, %v151
    %v153 = vld [vmem:[#allocation4] sm:$0x1]
    %v154 = vsel %vm86, %v152, 0.0
    %v155 = vsel %vm89, %v154, 0.0
    %156 = vadd.xlane.f32.xlu0 %v155
    %v157 = vpop.xlane.xlu0 %156
    %v158 = vrot.slane %v157, 4
    %v159 = vadd.f32 %v157, %v158
    %v160 = vrot.slane %v159, 2
    %v161 = vadd.f32 %v159, %v160
    %v162 = vrot.slane %v161, 1
    %v163 = vadd.f32 %v161, %v162
    %s164 = vtos %v163
    %v165 = vstv %s164
    %v166 = vadd.f32 %v153, %v165
    %167 = vst.msk [vmem:[#allocation4] sm:$0x1] %vm102, %v166
    // Predicated region
    $region14: #{tpu_custom_call.1} parent=1 // pred_check
      %p168 = pneg %p70
    $region15: #{tpu_custom_call.1} parent=1 // pred_check_branch
      %170 = sbr.rel (%p168) target = $region17
    $region16: #{tpu_custom_call.1} parent=1 // pred_region
      %v171 = vld [vmem:[#allocation2] sm:$0x1]
      %v172 = vadd.f32 %v171, 0.0
      %s173 = vtos %v172
      %s174 = scalar_lea.smem [#allocation5], 0
      %175 = sst [smem:[%s174]] %s173
      %v176 = vld [vmem:[#allocation3] sm:$0x1]
      %v177 = vadd.f32 %v176, 0.0
      %s178 = vtos %v177
      %s179 = scalar_lea.smem [#allocation7], 0
      %180 = sst [smem:[%s179]] %s178
      %v181 = vld [vmem:[#allocation4] sm:$0x1]
      %v182 = vadd.f32 %v181, 0.0
      %s183 = vtos %v182
      %s184 = scalar_lea.smem [#allocation9], 0
      %185 = sst [smem:[%s184]] %s183
    $region17: #{tpu_custom_call.1} parent=1 // pred_fallthru
      _
    // Predicated region
    $region18: #{tpu_custom_call.1} parent=1 // pred_check
      _
    $region19: #{tpu_custom_call.1} parent=1 // pred_check_branch
      %187 = sbr.rel (0) target = $region21
    $region20: #{tpu_custom_call.1} parent=1 // pred_region
      %s189 = ssub.s32 16, 16
      %190 = vsyncadd [#allocation6], %s189
      %193 = dma.smem_to_hbm [#allocation5], 16, %s2, [#allocation6]
    $region21: #{tpu_custom_call.1} parent=1 // pred_fallthru
      _
    // Predicated region
    $region22: #{tpu_custom_call.1} parent=1 // pred_check
      _
    $region23: #{tpu_custom_call.1} parent=1 // pred_check_branch
      %195 = sbr.rel (0) target = $region25
    $region24: #{tpu_custom_call.1} parent=1 // pred_region
      %s197 = ssub.s32 16, 16
      %198 = vsyncadd [#allocation8], %s197
      %201 = dma.smem_to_hbm [#allocation7], 16, %s3, [#allocation8]
    $region25: #{tpu_custom_call.1} parent=1 // pred_fallthru
      _
    // Predicated region
    $region26: #{tpu_custom_call.1} parent=1 // pred_check
      _
    $region27: #{tpu_custom_call.1} parent=1 // pred_check_branch
      %203 = sbr.rel (0) target = $region29
    $region28: #{tpu_custom_call.1} parent=1 // pred_region
      %s205 = ssub.s32 16, 16
      %206 = vsyncadd [#allocation8], %s205
      %209 = dma.smem_to_hbm [#allocation9], 16, %s4, [#allocation8]
    $region29: #{tpu_custom_call.1} parent=1 // pred_fallthru
      _
    // Predicated region
    $region30: #{tpu_custom_call.1} parent=1 // pred_check
      _
    $region31: #{tpu_custom_call.1} parent=1 // pred_check_branch
      %211 = sbr.rel (0) target = $region33
    $region32: #{tpu_custom_call.1} parent=1 // pred_region
      %212 = dma.done [#allocation6], 16
    $region33: #{tpu_custom_call.1} parent=1 // pred_fallthru
      _
    // Predicated region
    $region34: #{tpu_custom_call.1} parent=1 // pred_check
      _
    $region35: #{tpu_custom_call.1} parent=1 // pred_check_branch
      %214 = sbr.rel (0) target = $region37
    $region36: #{tpu_custom_call.1} parent=1 // pred_region
      %215 = dma.done [#allocation8], 16
    $region37: #{tpu_custom_call.1} parent=1 // pred_fallthru
      _
    // Predicated region
    $region38: #{tpu_custom_call.1} parent=1 // pred_check
      _
    $region39: #{tpu_custom_call.1} parent=1 // pred_check_branch
      %217 = sbr.rel (0) target = $region41
    $region40: #{tpu_custom_call.1} parent=1 // pred_region
      %218 = dma.done [#allocation8], 16
    $region41: #{tpu_custom_call.1} parent=1 // pred_fallthru
      _
    %219 = sfence
    %220 = vsyncpa [#allocation6], 1
    %221 = vsyncpa [#allocation8], 1

</llo_original>
